<compile_context>
chip_gen: v5e
topology: v5e:2x2
jax: 0.10.0
libtpu: 0.0.40
codegen_flags: <defaults>
</compile_context>

<pallas_src>
import functools

import jax
import jax.numpy as jnp
from jax.experimental import pallas as pl
from jax.experimental.pallas import tpu as pltpu

VOCAB_SIZES = (5, 6, 2)
VOCAB_PAD = 8                            # each table padded to 8 rows
NUM_FEATURES = len(VOCAB_SIZES)          # 3
TOTAL_ROWS = VOCAB_PAD * NUM_FEATURES    # 24
DEFAULT_TILE_E = 512                     # edges per grid step (tunable; 512-1024
                                         # for v5e/v6e, can go higher on v7x)
LANE = 128


def _round_up(x, m):
    return ((x + m - 1) // m) * m


def _bond_encoder_kernel(idx_ref, table_ref, out_ref):
    """One grid step: embed a tile of edges.

    idx_ref:   [tile_e, 3]     int32   (feature indices)
    table_ref: [24, d_pad]     float32 (3 stacked tables, 8 rows each)
    out_ref:   [tile_e, d_pad]
    """
    idx = idx_ref[...]                       # [tile_e, 3]
    tile_e = out_ref.shape[0]

    # 2-D multi-hot over the 24 stacked rows: for each edge, 3 ones (one per
    # feature, offset by 8*f into its slice of the stacked table).  Built with
    # compares + ORs directly in 2-D -- no [tile_e, 3, 24] intermediate.
    col = jax.lax.broadcasted_iota(jnp.int32, (tile_e, TOTAL_ROWS), 1)
    hit = idx[:, 0:1] == col
    for f in range(1, NUM_FEATURES):
        hit = hit | ((idx[:, f:f + 1] + f * VOCAB_PAD) == col)
    multihot = hit.astype(jnp.float32)       # [tile_e, 24]

    # Sum-of-embeddings == multihot @ stacked_table  (tiny MXU matmul).
    out_ref[...] = jnp.dot(
        multihot, table_ref[...], preferred_element_type=jnp.float32
    ).astype(out_ref.dtype)


@functools.partial(jax.jit, static_argnames=("tile_e", "out_dtype"))
def bond_encoder_pallas(edge_attr, stacked_table, *, tile_e=DEFAULT_TILE_E,
                        out_dtype=jnp.float32):
    """edge_attr: [E, 3] int, stacked_table: [24, emb_dim] f32 -> [E, emb_dim]."""
    E = edge_attr.shape[0]
    emb_dim = stacked_table.shape[1]

    # Lane-dense output stores: pad emb_dim up to a multiple of 128.
    d_pad = _round_up(emb_dim, LANE)
    table = stacked_table
    if d_pad != emb_dim:
        table = jnp.pad(stacked_table, ((0, 0), (0, d_pad - emb_dim)))

    # No host-side row padding of edge_attr: Pallas handles the ragged last
    # block (tail index rows are garbage, but those output rows are past E and
    # are never written back to HBM).
    tile = min(tile_e, _round_up(E, 8))
    grid = pl.cdiv(E, tile)
    idx = edge_attr.astype(jnp.int32)

    out = pl.pallas_call(
        _bond_encoder_kernel,
        out_shape=jax.ShapeDtypeStruct((E, d_pad), out_dtype),
        grid_spec=pltpu.PrefetchScalarGridSpec(
            num_scalar_prefetch=0,
            grid=(grid,),
            in_specs=[
                pl.BlockSpec((tile, NUM_FEATURES), lambda i: (i, 0)),
                # Constant block index -> table stays resident in VMEM across
                # all grid steps (not re-DMA'd per step).
                pl.BlockSpec((TOTAL_ROWS, d_pad), lambda i: (0, 0)),
            ],
            out_specs=pl.BlockSpec((tile, d_pad), lambda i: (i, 0)),
        ),
        compiler_params=pltpu.CompilerParams(
            dimension_semantics=("parallel",)),
    )(idx, table)

    if d_pad != emb_dim:
        out = out[:, :emb_dim]
    return out


def init_bond_encoder_params(key, emb_dim):
    """Xavier-uniform per table (matches torch.nn.init.xavier_uniform_), then
    stack the 3 tables padded to VOCAB_PAD rows each -> [24, emb_dim]."""
    tables = []
    for i, vocab in enumerate(VOCAB_SIZES):
        k = jax.random.fold_in(key, i)
        bound = (6.0 / (vocab + emb_dim)) ** 0.5
        w = jax.random.uniform(k, (vocab, emb_dim), jnp.float32, -bound, bound)
        w_pad = jnp.zeros((VOCAB_PAD, emb_dim), jnp.float32).at[:vocab].set(w)
        tables.append(w_pad)
    return jnp.concatenate(tables, axis=0)  # [24, emb_dim]


def bond_encoder_reference(edge_attr, stacked_table):
    """Pure-JAX reference matching the PyTorch forward."""
    out = 0
    for i, vocab in enumerate(VOCAB_SIZES):
        table = stacked_table[i * VOCAB_PAD: i * VOCAB_PAD + vocab]
        out = out + jnp.take(table, edge_attr[:, i], axis=0)
    return out


def _make_edge_attr(key, num_edges):
    cols = []
    for i, vocab in enumerate(VOCAB_SIZES):
        cols.append(jax.random.randint(
            jax.random.fold_in(key, i), (num_edges,), 0, vocab, jnp.int32))
    return jnp.stack(cols, axis=1)  # [E, 3]


if __name__ == "__main__":
    key = jax.random.PRNGKey(0)
    emb_dim = 128

    stacked_table = init_bond_encoder_params(key, emb_dim)

    # Small graph (E=10): single ragged tile.
    edge_attr = _make_edge_attr(jax.random.fold_in(key, 100), 10)
    out = jax.block_until_ready(bond_encoder_pallas(edge_attr, stacked_table))
    ref = bond_encoder_reference(edge_attr, stacked_table)
    assert out.shape == (10, emb_dim)
    assert jnp.allclose(out, ref, atol=1e-5, rtol=1e-5), "mismatch vs reference (E=10)"

    # Larger graph (E=1000): multiple grid steps + ragged tail at tile_e=512.
    edge_attr2 = _make_edge_attr(jax.random.fold_in(key, 200), 1000)
    out2 = jax.block_until_ready(bond_encoder_pallas(edge_attr2, stacked_table))
    ref2 = bond_encoder_reference(edge_attr2, stacked_table)
    assert out2.shape == (1000, emb_dim)
    assert jnp.allclose(out2, ref2, atol=1e-5, rtol=1e-5), "mismatch vs reference (E=1000)"

    print("KERNEL_OK")
</pallas_src>

<mosaic_0001>
module attributes {stable_mosaic.version = 11 : i64} {
  func.func @_bond_encoder_kernel(%arg0: i32, %arg1: memref<16x3xi32, #tpu.memory_space<vmem>>, %arg2: memref<24x128xf32, #tpu.memory_space<vmem>>, %arg3: memref<16x128xf32, #tpu.memory_space<vmem>>) attributes {dimension_semantics = [#tpu.dimension_semantics<parallel>], iteration_bounds = array<i64: 1>, scalar_prefetch = 0 : i64, scratch_operands = 0 : i64, tpu.core_type = #tpu.core_type<tc>, window_params = [{transform_indices = @transform_0, window_bounds = array<i64: 16, 3>}, {pipeline_mode = #tpu.pipeline_mode<synchronous>, transform_indices = @transform_1, window_bounds = array<i64: 24, 128>}, {transform_indices = @transform_2, window_bounds = array<i64: 16, 128>}]} {
    %c0 = arith.constant 0 : index
    %c0_0 = arith.constant 0 : index
    %0 = vector.load %arg1[%c0, %c0_0] : memref<16x3xi32, #tpu.memory_space<vmem>>, vector<16x3xi32>
    %1 = tpu.iota {dimensions = array<i32: 1>} : vector<16x24xi32>
    %2 = vector.extract_strided_slice %0 {offsets = [0, 0], sizes = [16, 1], strides = [1, 1]} : vector<16x3xi32> to vector<16x1xi32>
    %3 = vector.broadcast %2 : vector<16x1xi32> to vector<16x24xi32>
    %4 = arith.cmpi eq, %3, %1 : vector<16x24xi32>
    %5 = vector.extract_strided_slice %0 {offsets = [0, 1], sizes = [16, 1], strides = [1, 1]} : vector<16x3xi32> to vector<16x1xi32>
    %c8_i32 = arith.constant 8 : i32
    %6 = vector.broadcast %c8_i32 : i32 to vector<16x1xi32>
    %7 = arith.addi %5, %6 : vector<16x1xi32>
    %8 = vector.broadcast %7 : vector<16x1xi32> to vector<16x24xi32>
    %9 = arith.cmpi eq, %8, %1 : vector<16x24xi32>
    %10 = arith.ori %4, %9 : vector<16x24xi1>
    %11 = vector.extract_strided_slice %0 {offsets = [0, 2], sizes = [16, 1], strides = [1, 1]} : vector<16x3xi32> to vector<16x1xi32>
    %c16_i32 = arith.constant 16 : i32
    %12 = vector.broadcast %c16_i32 : i32 to vector<16x1xi32>
    %13 = arith.addi %11, %12 : vector<16x1xi32>
    %14 = vector.broadcast %13 : vector<16x1xi32> to vector<16x24xi32>
    %15 = arith.cmpi eq, %14, %1 : vector<16x24xi32>
    %16 = arith.ori %10, %15 : vector<16x24xi1>
    %17 = arith.extui %16 : vector<16x24xi1> to vector<16x24xi32>
    %18 = arith.sitofp %17 : vector<16x24xi32> to vector<16x24xf32>
    %c0_1 = arith.constant 0 : index
    %c0_2 = arith.constant 0 : index
    %19 = vector.load %arg2[%c0_1, %c0_2] : memref<24x128xf32, #tpu.memory_space<vmem>>, vector<24x128xf32>
    %cst = arith.constant dense<0.000000e+00> : vector<16x128xf32>
    %20 = tpu.matmul %18, %19, %cst {dimension_numbers = #tpu.dot_dimension_numbers<[1], [0], [0], [1], [0, 0, 1, 1], [], []>} : vector<16x24xf32>, vector<24x128xf32>, vector<16x128xf32> -> vector<16x128xf32>
    %c0_3 = arith.constant 0 : index
    %c0_4 = arith.constant 0 : index
    %21 = vector.load %arg3[%c0_3, %c0_4] : memref<16x128xf32, #tpu.memory_space<vmem>>, vector<16x128xf32>
    tpu.vector_store %arg3[%c0_3, %c0_4], %20 {strides = array<i32>} : memref<16x128xf32, #tpu.memory_space<vmem>>, vector<16x128xf32>,
    return
  }
  func.func @transform_0(%arg0: i32) -> (i32, i32) {
    %c0_i32 = arith.constant 0 : i32
    %c0_i32_0 = arith.constant 0 : i32
    return %arg0, %c0_i32 : i32, i32
  }
  func.func @transform_1(%arg0: i32) -> (i32, i32) {
    %c0_i32 = arith.constant 0 : i32
    %c0_i32_0 = arith.constant 0 : i32
    %c0_i32_1 = arith.constant 0 : i32
    return %c0_i32, %c0_i32_0 : i32, i32
  }
  func.func @transform_2(%arg0: i32) -> (i32, i32) {
    %c0_i32 = arith.constant 0 : i32
    %c0_i32_0 = arith.constant 0 : i32
    return %arg0, %c0_i32 : i32, i32
  }
}

</mosaic_0001>

<llo_original>
// kernel: bond_encoder_pallas.1
$region0: #{bond_encoder_pallas.1}
  #allocation0 [shape = 'u32[]', space=smem, size = 0x4, offset = 0x4, fixed_abs, tag = 'smem constant byte address 0x4 - core index']
  #allocation1 [shape = 'u32[72,128]{1,0:T(1,128)}', space=vmem, size = 0x9000, scoped, tag = 'internal scratch']
  %s0 = inlined_call_operand.vmem [shape: s32[10,3], index: 0, kind: input, shape index: {}]
  %s1 = inlined_call_operand.hbm [shape: f32[24,128], index: 1, kind: input, shape index: {}]
  %s2 = inlined_call_operand.hbm [shape: f32[10,128], index: 2, kind: output, shape index: {}]
  %s3 = sld [smem:[#allocation0]]
  $region22: #{bond_encoder_pallas.1} parent=0
    _
  %s5 = ssub.s32 1, %s3
  %s6 = scalar_select 0, %s5, %s3
  $region1: #{bond_encoder_pallas.1} parent=0
    #allocation2 [shape = 'u8[12288]{0}', space=vmem, size = 0x3000, scoped, tag = 'input window, operand 1, single buffered']
    #allocation3 [shape = 's32[1]{0}', space=sflag, size = 0x4, scoped, tag = 'scoped memory for bond_encoder_pallas.1']
    #allocation4 [shape = 's32[1]{0}', space=sflag, size = 0x4, scoped, tag = 'scoped memory for bond_encoder_pallas.1']
    #allocation5 [shape = 'u8[8192]{0}', space=vmem, size = 0x2000, scoped, tag = 'output window, operand 0, single buffered']
    %7 = vsyncpa [#allocation3], 0
    %8 = vsyncpa [#allocation4], 0
    // Predicated region
    $region2: #{bond_encoder_pallas.1} parent=1 // pred_check
      _
    $region3: #{bond_encoder_pallas.1} parent=1 // pred_check_branch
      %10 = sbr.rel (0) target = $region5
    $region4: #{bond_encoder_pallas.1} parent=1 // pred_region
      _
    $region5: #{bond_encoder_pallas.1} parent=1 // pred_fallthru
      _
    // Predicated region
    $region6: #{bond_encoder_pallas.1} parent=1 // pred_check
      _
    $region7: #{bond_encoder_pallas.1} parent=1 // pred_check_branch
      %12 = sbr.rel (0) target = $region9
    $region8: #{bond_encoder_pallas.1} parent=1 // pred_region
      %14 = vsyncadd [#allocation3], 0
      %s15 = sshll.u32 %s1, 4
      %s16 = int_to_ptr.hbm [resolvable:$true] %s15
      %s17 = sshll.u32 [#allocation2], 4
      %s18 = int_to_ptr.vmem [resolvable:$true] %s17
      %23 = dma.hbm_to_vmem [thread:$0]  %s16, 384, %s18, [#allocation3], 128, 128, 8
    $region9: #{bond_encoder_pallas.1} parent=1 // pred_fallthru
      _
    // Predicated region
    $region10: #{bond_encoder_pallas.1} parent=1 // pred_check
      _
    $region11: #{bond_encoder_pallas.1} parent=1 // pred_check_branch
      %25 = sbr.rel (0) target = $region13
    $region12: #{bond_encoder_pallas.1} parent=1 // pred_region
      %27 = dma.done [#allocation3], 384
    $region13: #{bond_encoder_pallas.1} parent=1 // pred_fallthru
      _
    %v28 = vld [vmem:[%s0] sm:$0xff]
    %v29 = vld [vmem:[%s0 + $0x8] sm:$0xff]
    %v30 = vlaneseq
    %v31 = vand.u32 %v30, 127
    %32 = vset.pattern.permute.xlu0 0
    %33 = vperm.xlu0 %32, %v28
    %v34 = vpop.permute.xlu0 %33
    %35 = vset.pattern.permute.xlu0 0
    %36 = vperm.xlu0 %35, %v29
    %v37 = vpop.permute.xlu0 %36
    %vm38 = vcmp.eq.s32.totalorder %v34, %v31
    %vm39 = vcmp.eq.s32.totalorder %v37, %v31
    %v40 = vadd.s32 %v28, 8
    %v41 = vadd.s32 %v29, 8
    %42 = vset.pattern.permute.xlu0 1
    %43 = vperm.xlu0 %42, %v40
    %v44 = vpop.permute.xlu0 %43
    %45 = vset.pattern.permute.xlu0 1
    %46 = vperm.xlu0 %45, %v41
    %v47 = vpop.permute.xlu0 %46
    %vm48 = vcmp.eq.s32.totalorder %v44, %v31
    %vm49 = vcmp.eq.s32.totalorder %v47, %v31
    %vm50 = vmor %vm38, %vm48
    %vm51 = vmor %vm39, %vm49
    %v52 = vadd.s32 %v28, 16
    %v53 = vadd.s32 %v29, 16
    %54 = vset.pattern.permute.xlu0 2
    %55 = vperm.xlu0 %54, %v52
    %v56 = vpop.permute.xlu0 %55
    %57 = vset.pattern.permute.xlu0 2
    %58 = vperm.xlu0 %57, %v53
    %v59 = vpop.permute.xlu0 %58
    %vm60 = vcmp.eq.s32.totalorder %v56, %v31
    %vm61 = vcmp.eq.s32.totalorder %v59, %v31
    %vm62 = vmor %vm50, %vm60
    %vm63 = vmor %vm51, %vm61
    %v64 = vsel %vm62, 1, 0
    %v65 = vsel %vm63, 1, 0
    %v66 = vcvt.s32.f32 %v64
    %v67 = vcvt.s32.f32 %v65
    %v68 = vld [vmem:[#allocation2] sm:$0xff]
    %v69 = vld [vmem:[#allocation2 + $0x8] sm:$0xff]
    %v70 = vld [vmem:[#allocation2 + $0x10] sm:$0xff]
    %vm71 = vcmask 195584
    %v73 = vsel %vm71, %v66, 0
    %v76 = vsel %vm71, %v67, 0
    %78 = vmatpush.msra.mxu0 0.0
    %79 = vmatpush.msra.mxu0 0.0
    %80 = vmatpush.msra.mxu0 0.0
    %81 = vmatpush.msra.mxu0 0.0
    %82 = vmatpush.msra.mxu0 0.0
    %83 = vmatpush.msra.mxu0 0.0
    %84 = vmatpush.msra.mxu0 0.0
    %85 = vmatpush.msra.mxu0 0.0
    %86 = vmatpush.msra.mxu0 0.0
    %87 = vmatpush.msra.mxu0 0.0
    %88 = vmatpush.msra.mxu0 0.0
    %89 = vmatpush.msra.mxu0 0.0
    %90 = vmatpush.msra.mxu0 0.0
    %91 = vmatpush.msra.mxu0 %v70
    %92 = vmatpush.msra.mxu0 %v69
    %93 = vmatpush.msra.mxu0 %v68
    %94 = vmatmul.f32.gmra.mxu0 %v73
    %v95 = vpop.f32.mrf.mxu0
    %v96 = vadd.f32 0.0, %v95
    %97 = vmatmul.f32.gmra.mxu0 %v76
    %v98 = vpop.f32.mrf.mxu0
    %v99 = vadd.f32 0.0, %v98
    %100 = vdwg.mxu0
    %101 = vst [vmem:[#allocation5] sm:$0xff] %v96
    %102 = vst [vmem:[#allocation5 + $0x8] sm:$0xff] %v99
    // Predicated region
    $region14: #{bond_encoder_pallas.1} parent=1 // pred_check
      _
    $region15: #{bond_encoder_pallas.1} parent=1 // pred_check_branch
      %104 = sbr.rel (0) target = $region17
    $region16: #{bond_encoder_pallas.1} parent=1 // pred_region
      %106 = vsyncadd [#allocation4], 0
      %s107 = sshll.u32 [#allocation5], 4
      %s108 = int_to_ptr.vmem [resolvable:$true] %s107
      %s109 = sshll.u32 %s2, 4
      %s110 = int_to_ptr.hbm [resolvable:$true] %s109
      %115 = dma.vmem_to_hbm [thread:$0]  %s108, 256, %s110, [#allocation4], 128, 128, 8
    $region17: #{bond_encoder_pallas.1} parent=1 // pred_fallthru
      _
    // Predicated region
    $region18: #{bond_encoder_pallas.1} parent=1 // pred_check
      _
    $region19: #{bond_encoder_pallas.1} parent=1 // pred_check_branch
      %117 = sbr.rel (0) target = $region21
    $region20: #{bond_encoder_pallas.1} parent=1 // pred_region
      %119 = dma.done [#allocation4], 256
    $region21: #{bond_encoder_pallas.1} parent=1 // pred_fallthru
      _
    %120 = vsyncpa [#allocation3], 1
    %121 = vsyncpa [#allocation4], 1

</llo_original>
